<compile_context>
chip_gen: v7x
topology: tpu7x:2x2x1
jax: 0.10.0
libtpu: 0.0.40
codegen_flags: <defaults>
</compile_context>

<pallas_src>
import jax
import jax.numpy as jnp
from jax import lax
from jax.experimental import pallas as pl
from jax.experimental.pallas import tpu as pltpu

_LANES = 128
_BLOCK_TARGET_BYTES = 4 * 1024 * 1024   # ~4 MiB (f32) per input block
_CHUNK_TARGET_BYTES = 256 * 1024        # ~256 KiB (f32) per inner chunk
_VMEM_LIMIT_BYTES = 40 * 1024 * 1024


def _cdiv(a, b):
    return (a + b - 1) // b


def _round_down(a, b):
    return (a // b) * b


def _make_kernel(*, W, chunk_rows, n_full, tail_rows, valid_rows_last, needs_mask):
    """Builds the per-(sample, row-tile) kernel.

    Kernel refs: x_ref/t_ref are (th, W) tiles of the sample, out_ref is the
    resident (3, W) accumulator of per-lane partial sums (bce, p*t, p+t).
    """

    def chunk_sums(x_ref, t_ref, off, rows, valid):
        x = x_ref[pl.ds(off, rows), :].astype(jnp.float32)
        t = t_ref[pl.ds(off, rows), :].astype(jnp.float32)
        # Shared transcendental: z = exp(-|x|) serves both the stable
        # BCE-with-logits and the sigmoid (1 exp + 1 log1p per element); the
        # sigmoid divide goes to the EUP as an approximate reciprocal.
        z = jnp.exp(-jnp.abs(x))
        bce = jnp.maximum(x, 0.0) - x * t + jnp.log1p(z)
        p = jnp.where(x >= 0.0, 1.0, z) * pl.reciprocal(1.0 + z, approx=True)
        inter = p * t
        union = p + t
        if valid is not None:
            # Mask rows past the logical end of the sample (last-tile overhang).
            rows_idx = lax.broadcasted_iota(jnp.int32, x.shape, 0)
            keep = rows_idx < valid
            bce = jnp.where(keep, bce, 0.0)
            inter = jnp.where(keep, inter, 0.0)
            union = jnp.where(keep, union, 0.0)
        return (jnp.sum(bce, axis=0, keepdims=True),
                jnp.sum(inter, axis=0, keepdims=True),
                jnp.sum(union, axis=0, keepdims=True))

    def tile_sums(x_ref, t_ref, masked):
        zero = jnp.zeros((1, W), jnp.float32)
        acc = (zero, zero, zero)
        if masked:
            # Only chunks intersecting the valid rows are processed; masked
            # tiles are chunk-aligned by construction (tail_rows == 0 there).
            n_chunks = min(n_full, _cdiv(valid_rows_last, chunk_rows))
            valid = valid_rows_last
        else:
            n_chunks = n_full
            valid = None

        if n_chunks > 1:
            def body(c, carry):
                off = pl.multiple_of(c * chunk_rows, chunk_rows)
                v = None if valid is None else valid - c * chunk_rows
                s = chunk_sums(x_ref, t_ref, off, chunk_rows, v)
                return tuple(a + b for a, b in zip(carry, s))
            acc = lax.fori_loop(0, n_chunks, body, acc)
        elif n_chunks == 1:
            s = chunk_sums(x_ref, t_ref, 0, chunk_rows, valid)
            acc = tuple(a + b for a, b in zip(acc, s))

        if (not masked) and tail_rows:
            s = chunk_sums(x_ref, t_ref, n_full * chunk_rows, tail_rows, None)
            acc = tuple(a + b for a, b in zip(acc, s))
        return acc

    def accumulate(x_ref, t_ref, out_ref, masked):
        bce_rows, inter_rows, union_rows = tile_sums(x_ref, t_ref, masked)
        # Sliced += (no sublane concatenate / relayout on the hot path).
        out_ref[0:1, :] += bce_rows
        out_ref[1:2, :] += inter_rows
        out_ref[2:3, :] += union_rows

    def kernel(x_ref, t_ref, out_ref):
        r = pl.program_id(1)

        @pl.when(r == 0)
        def _init():
            out_ref[...] = jnp.zeros_like(out_ref)

        if not needs_mask:
            accumulate(x_ref, t_ref, out_ref, masked=False)
        else:
            last = pl.num_programs(1) - 1

            @pl.when(r != last)
            def _interior():
                accumulate(x_ref, t_ref, out_ref, masked=False)

            @pl.when(r == last)
            def _last_tile():
                accumulate(x_ref, t_ref, out_ref, masked=True)

    return kernel


def dice_bce_loss(logits, targets, *,
                  block_target_bytes=_BLOCK_TARGET_BYTES,
                  chunk_target_bytes=_CHUNK_TARGET_BYTES):
    assert logits.shape == targets.shape and logits.ndim == 3
    B, H, W = logits.shape
    n = H * W

    # Physical lane footprint of one row (HBM/VMEM pad the minor dim to 128).
    w_lanes = _cdiv(W, _LANES) * _LANES
    row_bytes = w_lanes * 4                      # sized for f32 (conservative)

    # Inner chunk: ~chunk_target_bytes, multiple of 32 rows (safe for bf16/int8).
    chunk_rows = min(512, max(32, _round_down(chunk_target_bytes // row_bytes, 32)))

    # Row-tile: whole sample if it fits the block budget, else a multiple of
    # chunk_rows; the last tile's overhang is masked in-kernel (no jnp.pad).
    rows_cap = max(1, block_target_bytes // row_bytes)
    if H <= rows_cap:
        th = H
    else:
        th = max(chunk_rows, _round_down(rows_cap, chunk_rows))
        if th >= H:
            th = H
    chunk_rows = min(chunk_rows, th)
    nh = _cdiv(H, th)
    valid_rows_last = H - (nh - 1) * th
    needs_mask = valid_rows_last != th

    n_full = th // chunk_rows
    tail_rows = th - n_full * chunk_rows
    assert not (needs_mask and tail_rows), "masked tiles must be chunk-aligned"

    kernel = _make_kernel(W=W, chunk_rows=chunk_rows, n_full=n_full,
                          tail_rows=tail_rows, valid_rows_last=valid_rows_last,
                          needs_mask=needs_mask)

    partials = pl.pallas_call(
        kernel,
        out_shape=jax.ShapeDtypeStruct((B, 3, W), jnp.float32),
        grid_spec=pltpu.PrefetchScalarGridSpec(
            num_scalar_prefetch=0,
            grid=(B, nh),
            in_specs=[
                pl.BlockSpec((None, th, W), lambda b, r: (b, r, 0)),
                pl.BlockSpec((None, th, W), lambda b, r: (b, r, 0)),
            ],
            out_specs=pl.BlockSpec((None, 3, W), lambda b, r: (b, 0, 0)),
        ),
        compiler_params=pltpu.CompilerParams(
            dimension_semantics=("parallel", "arbitrary"),
            vmem_limit_bytes=_VMEM_LIMIT_BYTES,
        ),
    )(logits, targets)

    # Tiny final combine in plain JAX (per-sample lane reduce, smooth, means).
    bce_sum = jnp.sum(partials[:, 0, :])
    inter = jnp.sum(partials[:, 1, :], axis=-1)      # (B,)
    union = jnp.sum(partials[:, 2, :], axis=-1)      # (B,)

    smooth = 1.0
    bce_loss = bce_sum / float(B * n)
    dice_loss = jnp.mean(1.0 - (2.0 * inter + smooth) / (union + smooth))
    return bce_loss + dice_loss


def dice_bce_loss_ref(logits, targets):
    """Pure-JAX reference mirroring the PyTorch module."""
    x = logits.astype(jnp.float32)
    t = targets.astype(jnp.float32)
    bce = jnp.maximum(x, 0.0) - x * t + jnp.log1p(jnp.exp(-jnp.abs(x)))
    bce_loss = jnp.mean(bce)
    p = jax.nn.sigmoid(x)
    smooth = 1.0
    inter = jnp.sum(p * t, axis=(1, 2))
    union = jnp.sum(p, axis=(1, 2)) + jnp.sum(t, axis=(1, 2))
    dice_loss = jnp.mean(1.0 - (2.0 * inter + smooth) / (union + smooth))
    return bce_loss + dice_loss


if __name__ == "__main__":
    key = jax.random.PRNGKey(0)
    keys = jax.random.split(key, 8)
    TOL = dict(atol=5e-3, rtol=5e-3)   # approx EUP reciprocal: ~2^-12 rel. error

    # Case 1: (2, 16, 16) — whole sample in one block, no masking.
    B, H, W = 2, 16, 16
    logits = jax.random.normal(keys[0], (B, H, W), dtype=jnp.float32)
    targets = (jax.random.uniform(keys[1], (B, H, W)) > 0.5).astype(jnp.float32)
    loss = dice_bce_loss(logits, targets)
    jax.block_until_ready(loss)
    ref = dice_bce_loss_ref(logits, targets)
    assert jnp.allclose(loss, ref, **TOL), (loss, ref)

    # Case 2: ragged spatial dims (3, 10, 12) — full-dim block, no pad, no mask.
    logits2 = jax.random.normal(keys[2], (3, 10, 12), dtype=jnp.float32)
    targets2 = (jax.random.uniform(keys[3], (3, 10, 12)) > 0.5).astype(jnp.float32)
    loss2 = dice_bce_loss(logits2, targets2)
    ref2 = dice_bce_loss_ref(logits2, targets2)
    assert jnp.allclose(loss2, ref2, **TOL), (loss2, ref2)

    # Case 3: (2, 100, 16) with shrunken budgets to exercise the multi-tile
    # accumulator, inner fori_loop chunking, and masked last-tile paths.
    logits3 = jax.random.normal(keys[4], (2, 100, 16), dtype=jnp.float32)
    targets3 = (jax.random.uniform(keys[5], (2, 100, 16)) > 0.5).astype(jnp.float32)
    loss3 = dice_bce_loss(logits3, targets3,
                          block_target_bytes=64 * 128 * 4,
                          chunk_target_bytes=32 * 128 * 4)
    ref3 = dice_bce_loss_ref(logits3, targets3)
    assert jnp.allclose(loss3, ref3, **TOL), (loss3, ref3)

    # Case 4: narrow-dtype caller contract (bf16 logits, exact 0/1 bf16 targets);
    # the kernel upcasts internally, halving HBM traffic.
    logits4 = jax.random.normal(keys[6], (2, 64, 192), jnp.float32).astype(jnp.bfloat16)
    targets4 = (jax.random.uniform(keys[7], (2, 64, 192)) > 0.5).astype(jnp.bfloat16)
    loss4 = dice_bce_loss(logits4, targets4)
    ref4 = dice_bce_loss_ref(logits4, targets4)
    assert jnp.allclose(loss4, ref4, **TOL), (loss4, ref4)

    jax.block_until_ready((loss, loss2, loss3, loss4))
    print("KERNEL_OK")
</pallas_src>

<mosaic_0001>
module attributes {stable_mosaic.version = 11 : i64} {
  func.func @kernel(%arg0: i32, %arg1: i32, %arg2: memref<1x16x16xf32, #tpu.memory_space<vmem>>, %arg3: memref<1x16x16xf32, #tpu.memory_space<vmem>>, %arg4: memref<1x3x16xf32, #tpu.memory_space<vmem>>) attributes {dimension_semantics = [#tpu.dimension_semantics<parallel>, #tpu.dimension_semantics<arbitrary>], iteration_bounds = array<i64: 2, 1>, scalar_prefetch = 0 : i64, scratch_operands = 0 : i64, tpu.core_type = #tpu.core_type<tc>, window_params = [{transform_indices = @transform_0, window_bounds = array<i64: 1, 16, 16>}, {transform_indices = @transform_1, window_bounds = array<i64: 1, 16, 16>}, {transform_indices = @transform_2, window_bounds = array<i64: 1, 3, 16>}]} {
    %c0_i32 = arith.constant 0 : i32
    %0 = arith.cmpi eq, %arg1, %c0_i32 : i32
    %1 = arith.extui %0 : i1 to i32
    %c0_i32_0 = arith.constant 0 : i32
    %2 = arith.cmpi ne, %1, %c0_i32_0 : i32
    scf.if %2 {
      %cst_30 = arith.constant 0.000000e+00 : f32
      %55 = vector.broadcast %cst_30 : f32 to vector<3x16xf32>
      %c0_31 = arith.constant 0 : index
      %c0_32 = arith.constant 0 : index
      %c0_33 = arith.constant 0 : index
      %56 = vector.load %arg4[%c0_31, %c0_32, %c0_33] : memref<1x3x16xf32, #tpu.memory_space<vmem>>, vector<1x3x16xf32>
      %57 = vector.shape_cast %56 : vector<1x3x16xf32> to vector<3x16xf32>
      %58 = vector.shape_cast %55 : vector<3x16xf32> to vector<1x3x16xf32>
      tpu.vector_store %arg4[%c0_31, %c0_32, %c0_33], %58 {strides = array<i32>} : memref<1x3x16xf32, #tpu.memory_space<vmem>>, vector<1x3x16xf32>,
    } else {
    }
    %cst = arith.constant 0.000000e+00 : f32
    %3 = vector.broadcast %cst : f32 to vector<1x16xf32>
    %c0 = arith.constant 0 : index
    %c0_1 = arith.constant 0 : index
    %c0_2 = arith.constant 0 : index
    %4 = vector.load %arg2[%c0, %c0_1, %c0_2] : memref<1x16x16xf32, #tpu.memory_space<vmem>>, vector<1x16x16xf32>
    %5 = vector.shape_cast %4 : vector<1x16x16xf32> to vector<16x16xf32>
    %c0_3 = arith.constant 0 : index
    %c0_4 = arith.constant 0 : index
    %c0_5 = arith.constant 0 : index
    %6 = vector.load %arg3[%c0_3, %c0_4, %c0_5] : memref<1x16x16xf32, #tpu.memory_space<vmem>>, vector<1x16x16xf32>
    %7 = vector.shape_cast %6 : vector<1x16x16xf32> to vector<16x16xf32>
    %8 = math.absf %5 : vector<16x16xf32>
    %cst_6 = arith.constant 0.000000e+00 : f32
    %9 = vector.broadcast %cst_6 : f32 to vector<16x16xf32>
    %10 = arith.subf %9, %8 : vector<16x16xf32>
    %11 = math.exp %10 : vector<16x16xf32>
    %cst_7 = arith.constant 0.000000e+00 : f32
    %12 = vector.broadcast %cst_7 : f32 to vector<16x16xf32>
    %13 = arith.maximumf %5, %12 : vector<16x16xf32>
    %14 = arith.mulf %5, %7 : vector<16x16xf32>
    %15 = arith.subf %13, %14 : vector<16x16xf32>
    %16 = math.log1p %11 : vector<16x16xf32>
    %17 = arith.addf %15, %16 : vector<16x16xf32>
    %cst_8 = arith.constant 0.000000e+00 : f32
    %18 = vector.broadcast %cst_8 : f32 to vector<16x16xf32>
    %19 = arith.cmpf oge, %5, %18 : vector<16x16xf32>
    %cst_9 = arith.constant 1.000000e+00 : f32
    %20 = vector.broadcast %cst_9 : f32 to vector<16x16xf32>
    %21 = arith.select %19, %20, %11 : vector<16x16xi1>, vector<16x16xf32>
    %cst_10 = arith.constant 1.000000e+00 : f32
    %22 = vector.broadcast %cst_10 : f32 to vector<16x16xf32>
    %23 = arith.addf %22, %11 : vector<16x16xf32>
    %24 = tpu.reciprocal %23 {approx = true} : vector<16x16xf32> -> vector<16x16xf32>
    %25 = arith.mulf %21, %24 : vector<16x16xf32>
    %26 = arith.mulf %25, %7 : vector<16x16xf32>
    %27 = arith.addf %25, %7 : vector<16x16xf32>
    %cst_11 = arith.constant dense<0.000000e+00> : vector<16xf32>
    %28 = vector.multi_reduction <add>, %17, %cst_11 [0] : vector<16x16xf32> to vector<16xf32>
    %29 = vector.shape_cast %28 : vector<16xf32> to vector<1x16xf32>
    %cst_12 = arith.constant dense<0.000000e+00> : vector<16xf32>
    %30 = vector.multi_reduction <add>, %26, %cst_12 [0] : vector<16x16xf32> to vector<16xf32>
    %31 = vector.shape_cast %30 : vector<16xf32> to vector<1x16xf32>
    %cst_13 = arith.constant dense<0.000000e+00> : vector<16xf32>
    %32 = vector.multi_reduction <add>, %27, %cst_13 [0] : vector<16x16xf32> to vector<16xf32>
    %33 = vector.shape_cast %32 : vector<16xf32> to vector<1x16xf32>
    %34 = arith.addf %3, %29 : vector<1x16xf32>
    %35 = arith.addf %3, %31 : vector<1x16xf32>
    %36 = arith.addf %3, %33 : vector<1x16xf32>
    %c0_14 = arith.constant 0 : index
    %c0_15 = arith.constant 0 : index
    %c0_16 = arith.constant 0 : index
    %37 = vector.load %arg4[%c0_14, %c0_15, %c0_16] : memref<1x3x16xf32, #tpu.memory_space<vmem>>, vector<1x1x16xf32>
    %38 = vector.shape_cast %37 : vector<1x1x16xf32> to vector<1x16xf32>
    %39 = arith.addf %38, %34 : vector<1x16xf32>
    %c0_17 = arith.constant 0 : index
    %c0_18 = arith.constant 0 : index
    %c0_19 = arith.constant 0 : index
    %40 = vector.load %arg4[%c0_17, %c0_18, %c0_19] : memref<1x3x16xf32, #tpu.memory_space<vmem>>, vector<1x1x16xf32>
    %41 = vector.shape_cast %40 : vector<1x1x16xf32> to vector<1x16xf32>
    %42 = vector.shape_cast %39 : vector<1x16xf32> to vector<1x1x16xf32>
    tpu.vector_store %arg4[%c0_17, %c0_18, %c0_19], %42 {strides = array<i32>} : memref<1x3x16xf32, #tpu.memory_space<vmem>>, vector<1x1x16xf32>,
    %c0_20 = arith.constant 0 : index
    %c1 = arith.constant 1 : index
    %c0_21 = arith.constant 0 : index
    %43 = vector.load %arg4[%c0_20, %c1, %c0_21] : memref<1x3x16xf32, #tpu.memory_space<vmem>>, vector<1x1x16xf32>
    %44 = vector.shape_cast %43 : vector<1x1x16xf32> to vector<1x16xf32>
    %45 = arith.addf %44, %35 : vector<1x16xf32>
    %c0_22 = arith.constant 0 : index
    %c1_23 = arith.constant 1 : index
    %c0_24 = arith.constant 0 : index
    %46 = vector.load %arg4[%c0_22, %c1_23, %c0_24] : memref<1x3x16xf32, #tpu.memory_space<vmem>>, vector<1x1x16xf32>
    %47 = vector.shape_cast %46 : vector<1x1x16xf32> to vector<1x16xf32>
    %48 = vector.shape_cast %45 : vector<1x16xf32> to vector<1x1x16xf32>
    tpu.vector_store %arg4[%c0_22, %c1_23, %c0_24], %48 {strides = array<i32>} : memref<1x3x16xf32, #tpu.memory_space<vmem>>, vector<1x1x16xf32>,
    %c0_25 = arith.constant 0 : index
    %c2 = arith.constant 2 : index
    %c0_26 = arith.constant 0 : index
    %49 = vector.load %arg4[%c0_25, %c2, %c0_26] : memref<1x3x16xf32, #tpu.memory_space<vmem>>, vector<1x1x16xf32>
    %50 = vector.shape_cast %49 : vector<1x1x16xf32> to vector<1x16xf32>
    %51 = arith.addf %50, %36 : vector<1x16xf32>
    %c0_27 = arith.constant 0 : index
    %c2_28 = arith.constant 2 : index
    %c0_29 = arith.constant 0 : index
    %52 = vector.load %arg4[%c0_27, %c2_28, %c0_29] : memref<1x3x16xf32, #tpu.memory_space<vmem>>, vector<1x1x16xf32>
    %53 = vector.shape_cast %52 : vector<1x1x16xf32> to vector<1x16xf32>
    %54 = vector.shape_cast %51 : vector<1x16xf32> to vector<1x1x16xf32>
    tpu.vector_store %arg4[%c0_27, %c2_28, %c0_29], %54 {strides = array<i32>} : memref<1x3x16xf32, #tpu.memory_space<vmem>>, vector<1x1x16xf32>,
    return
  }
  func.func @transform_0(%arg0: i32, %arg1: i32) -> (i32, i32, i32) {
    %c0_i32 = arith.constant 0 : i32
    %c0_i32_0 = arith.constant 0 : i32
    return %arg0, %arg1, %c0_i32 : i32, i32, i32
  }
  func.func @transform_1(%arg0: i32, %arg1: i32) -> (i32, i32, i32) {
    %c0_i32 = arith.constant 0 : i32
    %c0_i32_0 = arith.constant 0 : i32
    return %arg0, %arg1, %c0_i32 : i32, i32, i32
  }
  func.func @transform_2(%arg0: i32, %arg1: i32) -> (i32, i32, i32) {
    %c0_i32 = arith.constant 0 : i32
    %c0_i32_0 = arith.constant 0 : i32
    %c0_i32_1 = arith.constant 0 : i32
    return %arg0, %c0_i32, %c0_i32_0 : i32, i32, i32
  }
}

</mosaic_0001>

<llo_original>
// kernel: tpu_custom_call.1
$region0: #{tpu_custom_call.1}
  #allocation0 [shape = 'u32[]', space=smem, size = 0x4, offset = 0x4, fixed_abs, tag = 'smem constant byte address 0x4 - core index']
  #allocation1 [shape = 'u32[144,128]{1,0:T(1,128)}', space=vmem, size = 0x12000, scoped, tag = 'internal scratch']
  %s0 = inlined_call_operand.hbm [shape: f32[2,16,16], index: 0, kind: input, shape index: {}]
  %s1 = inlined_call_operand.hbm [shape: f32[2,16,16], index: 1, kind: input, shape index: {}]
  %s2 = inlined_call_operand.vmem [shape: f32[2,3,16], index: 2, kind: output, shape index: {}]
  %s3 = sld [smem:[#allocation0]]
  $region53: #{tpu_custom_call.1} parent=0
    _
  %s5 = ssub.s32 1, %s3
  %s6 = scalar_select 0, %s5, %s3
  $region1: #{tpu_custom_call.1} parent=0
    #allocation2 [shape = 'u8[16384]{0}', space=vmem, size = 0x4000, scoped, tag = 'input window, operand 0']
    #allocation3 [shape = 's32[2]{0}', space=sflag, size = 0x8, scoped, tag = 'scoped memory for tpu_custom_call.1']
    #allocation4 [shape = 'u8[16384]{0}', space=vmem, size = 0x4000, scoped, tag = 'input window, operand 1']
    #allocation5 [shape = 's32[2]{0}', space=sflag, size = 0x8, scoped, tag = 'scoped memory for tpu_custom_call.1']
    %7 = vsyncpa [#allocation3], 0
    %s8 = scalar_lea.sflag [#allocation3], 1
    %9 = vsyncpa %s8, 0
    %10 = vsyncpa [#allocation5], 0
    %s11 = scalar_lea.sflag [#allocation5], 1
    %12 = vsyncpa %s11, 0
    loop: start=0, step=1, limit=4
    $region2: #{tpu_custom_call.1} parent=1 // loop_pre_header
      _
    $region3: #{tpu_custom_call.1} parent=1 // loop_header
      %s14 = sphi 0, %s18
      %p15 = scmp.ge.s32.totalorder %s14, 4
      %s21 = sphi 0, %s33
      %s22 = sphi 0, %s29
      %s23 = sphi 0, %s21
      %s24 = sphi 0, %s22
      %s25 = sphi 0, %s23
      %s26 = sphi 0, %s24
      %s38 = sphi 0, %s40
      %s41 = sphi 0, %s38
      %s42 = sphi 0, %s41
      %s58 = sphi 0, %s42
      %s66 = sphi 0, %s68
      %s69 = sphi 0, %s66
      %s70 = sphi 0, %s69
      %s86 = sphi 0, %s70
      %s92 = sphi 0, %s94
      %s95 = sphi 0, %s92
      %s96 = sphi 0, %s95
      %s112 = sphi 0, %s96
    $region4: #{tpu_custom_call.1} parent=1 // loop_header_branch
      %17 = sbr.rel (%p15) target = $region8
    $region5: #{tpu_custom_call.1} parent=1 // loop_body
      %s19 = ssub.s32 %s14, 1
      %s20 = ssub.s32 %s14, 2
      %s27 = sadd.s32 1, %s22
      %p28 = scmp.ge.s32.totalorder %s27, 1
      %s29 = scalar_select %p28, 0, %s27
      %s30 = sadd.s32 1, %s21
      %s31 = scalar_select %p28, %s30, %s21
      %p32 = scmp.ge.s32.totalorder %s31, 2
      %s33 = scalar_select %p32, 0, %s31
      %s34 = ssub.s32 %s21, %s33
      %s35 = ssub.s32 %s22, %s29
      %s36 = sor.u32 %s34, %s35
      %p37 = scmp.eq.s32.totalorder %s36, 0
      %s39 = sadd.s32 %s38, 1
      %s40 = scalar_select %p37, %s38, %s39
      %p43 = pneg %p37
      %p44 = scmp.eq.s32.totalorder %s14, 1
      %p45 = por %p43, %p44
      %p46 = scmp.ne.s32.totalorder %s38, %s41
      %p47 = scmp.eq.s32.totalorder %s14, 0
      %p48 = por %p46, %p47
      %p49 = scmp.ne.s32.totalorder %s38, %s41
      %p50 = scmp.eq.s32.totalorder %s19, 1
      %p51 = por %p49, %p50
      %p52 = scmp.ne.s32.totalorder %s41, %s42
      %p53 = scmp.eq.s32.totalorder %s19, 0
      %p54 = por %p52, %p53
      %p55 = scmp.ne.s32.totalorder %s41, %s42
      %p56 = scmp.eq.s32.totalorder %s20, 1
      %p57 = por %p55, %p56
      %p59 = scmp.ne.s32.totalorder %s42, %s58
      %p60 = scmp.eq.s32.totalorder %s20, 0
      %p61 = por %p59, %p60
      %s62 = ssub.s32 %s21, %s33
      %s63 = ssub.s32 %s22, %s29
      %s64 = sor.u32 %s62, %s63
      %p65 = scmp.eq.s32.totalorder %s64, 0
      %s67 = sadd.s32 %s66, 1
      %s68 = scalar_select %p65, %s66, %s67
      %p71 = pneg %p65
      %p72 = scmp.eq.s32.totalorder %s14, 1
      %p73 = por %p71, %p72
      %p74 = scmp.ne.s32.totalorder %s66, %s69
      %p75 = scmp.eq.s32.totalorder %s14, 0
      %p76 = por %p74, %p75
      %p77 = scmp.ne.s32.totalorder %s66, %s69
      %p78 = scmp.eq.s32.totalorder %s19, 1
      %p79 = por %p77, %p78
      %p80 = scmp.ne.s32.totalorder %s69, %s70
      %p81 = scmp.eq.s32.totalorder %s19, 0
      %p82 = por %p80, %p81
      %p83 = scmp.ne.s32.totalorder %s69, %s70
      %p84 = scmp.eq.s32.totalorder %s20, 1
      %p85 = por %p83, %p84
      %p87 = scmp.ne.s32.totalorder %s70, %s86
      %p88 = scmp.eq.s32.totalorder %s20, 0
      %p89 = por %p87, %p88
      %s90 = ssub.s32 %s21, %s33
      %p91 = scmp.eq.s32.totalorder %s90, 0
      %s93 = sadd.s32 %s92, 1
      %s94 = scalar_select %p91, %s92, %s93
      %p97 = pneg %p91
      %p98 = scmp.eq.s32.totalorder %s14, 1
      %p99 = por %p97, %p98
      %p100 = scmp.ne.s32.totalorder %s92, %s95
      %p101 = scmp.eq.s32.totalorder %s14, 0
      %p102 = por %p100, %p101
      %p103 = scmp.ne.s32.totalorder %s92, %s95
      %p104 = scmp.eq.s32.totalorder %s19, 1
      %p105 = por %p103, %p104
      %p106 = scmp.ne.s32.totalorder %s95, %s96
      %p107 = scmp.eq.s32.totalorder %s19, 0
      %p108 = por %p106, %p107
      %p109 = scmp.ne.s32.totalorder %s95, %s96
      %p110 = scmp.eq.s32.totalorder %s20, 1
      %p111 = por %p109, %p110
      %p113 = scmp.ne.s32.totalorder %s96, %s112
      %p114 = scmp.eq.s32.totalorder %s20, 0
      %p115 = por %p113, %p114
      %p116 = scmp.le.s32.totalorder 1, %s14
      %p117 = scmp.lt.s32.totalorder %s14, 3
      %p118 = pnand %p116, %p117
      %p119 = pneg %p118
      // Predicated region
      $region9: #{tpu_custom_call.1} parent=5 // pred_check
        _
      $region10: #{tpu_custom_call.1} parent=5 // pred_check_branch
        %121 = sbr.rel (%p118) target = $region12
      $region11: #{tpu_custom_call.1} parent=5 // pred_region
        %s122 = ssub.s32 %s14, 1
      $region12: #{tpu_custom_call.1} parent=5 // pred_fallthru
        _
      %p123 = scmp.lt.s32.totalorder %s14, 2
      // Predicated region
      $region13: #{tpu_custom_call.1} parent=5 // pred_check
        %p124 = pneg %p123
      $region14: #{tpu_custom_call.1} parent=5 // pred_check_branch
        %126 = sbr.rel (%p124) target = $region16
      $region15: #{tpu_custom_call.1} parent=5 // pred_region
        // Predicated region
        $region17: #{tpu_custom_call.1} parent=15 // pred_check
          %p127 = pneg %p48
        $region18: #{tpu_custom_call.1} parent=15 // pred_check_branch
          %129 = sbr.rel (%p127) target = $region20
        $region19: #{tpu_custom_call.1} parent=15 // pred_region
          %s130 = sand.u32 %s38, 1
          %s131 = scalar_lea.sflag [#allocation3], %s130
          %s132 = sand.u32 %s38, 1
          %s133 = smul.addr %s132, 16
          %s134 = scalar_lea.vmem [#allocation2], %s133
          %s135 = smul.u32 2, %s22
          %s137 = ssub.s32 256, 256
          %138 = vsyncadd %s131, %s137
          %s139 = smul.addr %s21, 2
          %s140 = sadd.s32 %s135, %s139
          %s141 = smul.addr %s140, 128
          %s142 = scalar_lea.hbm %s0, %s141
          %s143 = sshll.u32 %s134, 4
          %s144 = int_to_ptr.vmem [resolvable:$true] %s143
          %149 = dma.hbm_to_vmem [thread:$0]  %s142, 256, %s144, %s131, 128, 128, 8
        $region20: #{tpu_custom_call.1} parent=15 // pred_fallthru
          _
        // Predicated region
        $region21: #{tpu_custom_call.1} parent=15 // pred_check
          %p150 = pneg %p76
        $region22: #{tpu_custom_call.1} parent=15 // pred_check_branch
          %152 = sbr.rel (%p150) target = $region24
        $region23: #{tpu_custom_call.1} parent=15 // pred_region
          %s153 = sand.u32 %s66, 1
          %s154 = scalar_lea.sflag [#allocation5], %s153
          %s155 = sand.u32 %s66, 1
          %s156 = smul.addr %s155, 16
          %s157 = scalar_lea.vmem [#allocation4], %s156
          %s158 = smul.u32 2, %s22
          %s160 = ssub.s32 256, 256
          %161 = vsyncadd %s154, %s160
          %s162 = smul.addr %s21, 2
          %s163 = sadd.s32 %s158, %s162
          %s164 = smul.addr %s163, 128
          %s165 = scalar_lea.hbm %s1, %s164
          %s166 = sshll.u32 %s157, 4
          %s167 = int_to_ptr.vmem [resolvable:$true] %s166
          %172 = dma.hbm_to_vmem [thread:$0]  %s165, 256, %s167, %s154, 128, 128, 8
        $region24: #{tpu_custom_call.1} parent=15 // pred_fallthru
          _
      $region16: #{tpu_custom_call.1} parent=5 // pred_fallthru
        _
      %p173 = scmp.le.s32.totalorder 1, %s14
      %p174 = scmp.lt.s32.totalorder %s14, 3
      %p175 = pnand %p173, %p174
      %p176 = pneg %p175
      // Predicated region
      $region25: #{tpu_custom_call.1} parent=5 // pred_check
        _
      $region26: #{tpu_custom_call.1} parent=5 // pred_check_branch
        %178 = sbr.rel (%p175) target = $region28
      $region27: #{tpu_custom_call.1} parent=5 // pred_region
        %s179 = ssub.s32 %s14, 1
        %s180 = sand.u32 %s41, 1
        %s181 = scalar_lea.sflag [#allocation3], %s180
        %s182 = sand.u32 %s41, 1
        %s183 = smul.addr %s182, 16
        %s184 = scalar_lea.vmem [#allocation2], %s183
        // Predicated region
        $region29: #{tpu_custom_call.1} parent=27 // pred_check
          %p185 = pneg %p54
        $region30: #{tpu_custom_call.1} parent=27 // pred_check_branch
          %187 = sbr.rel (%p185) target = $region32
        $region31: #{tpu_custom_call.1} parent=27 // pred_region
          %188 = dma.done %s181, 256
        $region32: #{tpu_custom_call.1} parent=27 // pred_fallthru
          _
        %s189 = sand.u32 %s69, 1
        %s190 = scalar_lea.sflag [#allocation5], %s189
        %s191 = sand.u32 %s69, 1
        %s192 = smul.addr %s191, 16
        %s193 = scalar_lea.vmem [#allocation4], %s192
        // Predicated region
        $region33: #{tpu_custom_call.1} parent=27 // pred_check
          %p194 = pneg %p82
        $region34: #{tpu_custom_call.1} parent=27 // pred_check_branch
          %196 = sbr.rel (%p194) target = $region36
        $region35: #{tpu_custom_call.1} parent=27 // pred_region
          %197 = dma.done %s190, 256
        $region36: #{tpu_custom_call.1} parent=27 // pred_fallthru
          _
        %s198 = sand.u32 %s41, 1
        %s199 = scalar_lea.sflag [#allocation3], %s198
        %s200 = sand.u32 %s41, 1
        %s201 = smul.addr %s200, 16
        %s202 = scalar_lea.vmem [#allocation2], %s201
        %p203 = pneg %p54
        %p204 = pneg %p51
        %s205 = sand.u32 %s69, 1
        %s206 = scalar_lea.sflag [#allocation5], %s205
        %s207 = sand.u32 %s69, 1
        %s208 = smul.addr %s207, 16
        %s209 = scalar_lea.vmem [#allocation4], %s208
        %p210 = pneg %p82
        %p211 = pneg %p79
        %p212 = pneg %p108
        %p213 = pneg %p105
        %p214 = scmp.lt.s32.totalorder %s23, 1
        %s215 = scalar_select %p214, %s23, 1
        %s216 = smul.addr %s215, 4
        %s217 = scalar_lea.vmem %s2, %s216
        %s218 = smul.u32 2, %s24
        %s219 = smul.u32 2, %s24
        %p220 = scmp.lt.s32.totalorder %s23, 1
        %s221 = scalar_select %p220, %s23, 1
        %s222 = smul.addr %s221, 4
        %s223 = scalar_lea.vmem %s2, %s222
        %p224 = scmp.eq.s32.totalorder %s24, 0
        // Predicated region
        $region37: #{tpu_custom_call.1} parent=27 // pred_check
          %p225 = pneg %p224
        $region38: #{tpu_custom_call.1} parent=27 // pred_check_branch
          %227 = sbr.rel (%p225) target = $region40
        $region39: #{tpu_custom_call.1} parent=27 // pred_region
          %vm228 = vcmask 124928
          %229 = vst.msk [vmem:[%s223] sm:$0x7] %vm228, 0.0
        $region40: #{tpu_custom_call.1} parent=27 // pred_fallthru
          _
        %v230 = vld [vmem:[%s184] sm:$0xff]
        %v231 = vld [vmem:[%s184 + $0x8] sm:$0xff]
        %v232 = vld [vmem:[%s193] sm:$0xff]
        %v233 = vld [vmem:[%s193 + $0x8] sm:$0xff]
        %v234 = vand.u32 2147483647, %v230
        %v235 = vand.u32 2147483647, %v231
        %v236 = vsub.f32 0.0, %v234
        %v237 = vsub.f32 0.0, %v235
        %v238 = vmul.f32 %v236, 1.442695
        %v239 = vpow.pop %v238
        %v240 = vmul.f32 %v237, 1.442695
        %v241 = vpow.pop %v240
        %v242 = vmax.f32 %v230, 0.0
        %v243 = vmax.f32 %v231, 0.0
        %v244 = vmul.f32 %v230, %v232
        %v245 = vmul.f32 %v231, %v233
        %v246 = vsub.f32 %v242, %v244
        %v247 = vsub.f32 %v243, %v245
        %v248 = vadd.f32 %v239, 1.0
        %v249 = vlog2.pop %v248
        %v250 = vmul.f32 %v249, 0.6931472
        %v251 = vmul.f32 -0.5, %v239
        %v252 = vadd.f32 %v251, 1.0
        %v253 = vmul.f32 %v252, %v239
        %v254 = vand.u32 2147483647, %v239
        %vm255 = vcmp.lt.f32.partialorder %v254, 0.0004427343
        %v256 = vsel %vm255, %v253, %v250
        %v257 = vadd.f32 %v241, 1.0
        %v258 = vlog2.pop %v257
        %v259 = vmul.f32 %v258, 0.6931472
        %v260 = vmul.f32 -0.5, %v241
        %v261 = vadd.f32 %v260, 1.0
        %v262 = vmul.f32 %v261, %v241
        %v263 = vand.u32 2147483647, %v241
        %vm264 = vcmp.lt.f32.partialorder %v263, 0.0004427343
        %v265 = vsel %vm264, %v262, %v259
        %v266 = vadd.f32 %v246, %v256
        %v267 = vadd.f32 %v247, %v265
        %vm268 = vcmp.ge.f32.partialorder %v230, 0.0
        %vm269 = vcmp.ge.f32.partialorder %v231, 0.0
        %v270 = vsel %vm268, 1.0, %v239
        %v271 = vsel %vm269, 1.0, %v241
        %v272 = vadd.f32 %v239, 1.0
        %v273 = vadd.f32 %v241, 1.0
        %v274 = vrcp.pop %v272
        %v275 = vrcp.pop %v273
        %v276 = vmul.f32 %v270, %v274
        %v277 = vmul.f32 %v271, %v275
        %v278 = vmul.f32 %v276, %v232
        %v279 = vmul.f32 %v277, %v233
        %v280 = vadd.f32 %v276, %v232
        %v281 = vadd.f32 %v277, %v233
        %vm282 = vcmask 130048
        %v283 = vsel %vm282, %v266, 0.0
        %v284 = vsel %vm282, %v267, 0.0
        %v285 = vadd.f32 %v283, %v284
        %v286 = vrot.slane %v285, 4
        %v287 = vadd.f32 %v285, %v286
        %v288 = vrot.slane %v287, 2
        %v289 = vadd.f32 %v287, %v288
        %v290 = vrot.slane %v289, 1
        %v291 = vadd.f32 %v289, %v290
        %v292 = vsel %vm282, %v278, 0.0
        %v293 = vsel %vm282, %v279, 0.0
        %v294 = vadd.f32 %v292, %v293
        %v295 = vrot.slane %v294, 4
        %v296 = vadd.f32 %v294, %v295
        %v297 = vrot.slane %v296, 2
        %v298 = vadd.f32 %v296, %v297
        %v299 = vrot.slane %v298, 1
        %v300 = vadd.f32 %v298, %v299
        %v301 = vsel %vm282, %v280, 0.0
        %v302 = vsel %vm282, %v281, 0.0
        %v303 = vadd.f32 %v301, %v302
        %v304 = vrot.slane %v303, 4
        %v305 = vadd.f32 %v303, %v304
        %v306 = vrot.slane %v305, 2
        %v307 = vadd.f32 %v305, %v306
        %v308 = vrot.slane %v307, 1
        %v309 = vadd.f32 %v307, %v308
        %v310 = vadd.f32 %v291, 0.0
        %v311 = vadd.f32 %v300, 0.0
        %v312 = vadd.f32 %v309, 0.0
        %v313 = vld [vmem:[%s223] sm:$0x1]
        %v314 = vadd.f32 %v313, %v310
        %vm315 = vcmask 122880
        %316 = vst.msk [vmem:[%s223] sm:$0x1] %vm315, %v314
        %v317 = vld [vmem:[%s223 + $0x1] sm:$0x1]
        %v318 = vadd.f32 %v317, %v311
        %319 = vst.msk [vmem:[%s223 + $0x1] sm:$0x1] %vm315, %v318
        %v320 = vld [vmem:[%s223 + $0x2] sm:$0x1]
        %v321 = vadd.f32 %v320, %v312
        %322 = vst.msk [vmem:[%s223 + $0x2] sm:$0x1] %vm315, %v321
        %p323 = scmp.lt.s32.totalorder %s23, 1
        %s324 = scalar_select %p323, %s23, 1
        %s325 = smul.addr %s324, 4
        %s326 = scalar_lea.vmem %s2, %s325
        // Predicated region
        $region41: #{tpu_custom_call.1} parent=27 // pred_check
          %p327 = pneg %p105
        $region42: #{tpu_custom_call.1} parent=27 // pred_check_branch
          %329 = sbr.rel (%p327) target = $region44
        $region43: #{tpu_custom_call.1} parent=27 // pred_region
          _
        $region44: #{tpu_custom_call.1} parent=27 // pred_fallthru
          _
      $region28: #{tpu_custom_call.1} parent=5 // pred_fallthru
        _
      %p330 = scmp.le.s32.totalorder 2, %s14
      // Predicated region
      $region45: #{tpu_custom_call.1} parent=5 // pred_check
        %p331 = pneg %p330
      $region46: #{tpu_custom_call.1} parent=5 // pred_check_branch
        %333 = sbr.rel (%p331) target = $region48
      $region47: #{tpu_custom_call.1} parent=5 // pred_region
        %s334 = ssub.s32 %s14, 2
        // Predicated region
        $region49: #{tpu_custom_call.1} parent=47 // pred_check
          %p335 = pneg %p111
        $region50: #{tpu_custom_call.1} parent=47 // pred_check_branch
          %337 = sbr.rel (%p335) target = $region52
        $region51: #{tpu_custom_call.1} parent=47 // pred_region
          %p338 = scmp.lt.s32.totalorder %s25, 1
          %s339 = scalar_select %p338, %s25, 1
          %s340 = smul.addr %s339, 4
          %s341 = scalar_lea.vmem %s2, %s340
        $region52: #{tpu_custom_call.1} parent=47 // pred_fallthru
          _
      $region48: #{tpu_custom_call.1} parent=5 // pred_fallthru
        _
    $region6: #{tpu_custom_call.1} parent=1 // loop_footer
      %s18 = sadd.s32 1, %s14
    $region7: #{tpu_custom_call.1} parent=1 // loop_footer_branch
      %13 = sbr.rel target = $region3
    $region8: #{tpu_custom_call.1} parent=1 // loop_exit
      _
    %342 = vsyncpa [#allocation3], 1
    %s343 = scalar_lea.sflag [#allocation3], 1
    %344 = vsyncpa %s343, 1
    %345 = vsyncpa [#allocation5], 1
    %s346 = scalar_lea.sflag [#allocation5], 1
    %347 = vsyncpa %s346, 1

</llo_original>
